<compile_context>
chip_gen: v7x
topology: tpu7x:2x2x1
jax: 0.10.0
libtpu: 0.0.40
codegen_flags: <defaults>
</compile_context>

<pallas_src>
import jax
import jax.numpy as jnp
from jax.experimental import pallas as pl
from jax.experimental.pallas import tpu as pltpu

EPS = 1e-5


def _prenorm_kernel(x_ref, w_ref, cb_ref, o_ref):
    """x_ref: (C, TS) tile, pixels on lanes.
    w_ref: (C_out, C) folded weight (conv_w * g).
    cb_ref: (C_out, 1) folded bias (conv_w @ b + conv_b)."""
    x = x_ref[...].astype(jnp.float32)                    # (C, TS)
    c = x.shape[0]
    inv_c = jnp.float32(1.0 / c)

    # Single-pass moments over the channel (sublane) axis; unbiased=False.
    m1 = jnp.sum(x, axis=0, keepdims=True) * inv_c        # (1, TS)
    m2 = jnp.sum(x * x, axis=0, keepdims=True) * inv_c    # (1, TS)
    var = m2 - m1 * m1
    xn = (x - m1) * jax.lax.rsqrt(var + EPS)              # (C, TS)

    w = w_ref[...]                                        # (C_out, C), f32
    cb = cb_ref[...]                                      # (C_out, 1), f32

    if c <= 32:
        # Tiny channel count: MXU would run at ~c/256 efficiency, so do the
        # 1x1 conv as a VPU broadcast-MAC (outer-product accumulate).
        acc = w[:, 0:1] * xn[0:1, :]                      # (C_out, TS)
        for k in range(1, c):
            acc = acc + w[:, k:k + 1] * xn[k:k + 1, :]
    else:
        # Wide channels: MXU matmul; bf16 inputs for v6e/v7x MXU rate,
        # f32 accumulation (normalization math itself stays f32 for v5e).
        acc = jnp.dot(w.astype(jnp.bfloat16), xn.astype(jnp.bfloat16),
                      preferred_element_type=jnp.float32)

    o_ref[...] = (acc + cb).astype(o_ref.dtype)


def _pick_spatial_tile(hw, c, c_out, in_itemsize, out_itemsize,
                       tile_hw, vmem_cap_bytes):
    """Largest multiple-of-128 tile that divides hw and fits the VMEM budget
    (double-buffered input + output blocks plus f32 temps)."""
    per_lane = 2 * (c * in_itemsize + c_out * out_itemsize) + (2 * c + c_out + 4) * 4
    limit = min(tile_hw, max(128, vmem_cap_bytes // max(per_lane, 1)))
    ts = hw  # full spatial row is always a legal block shape (fallback)
    for t in range(128, hw + 1, 128):
        if hw % t == 0 and t <= limit:
            ts = t
    return ts


def prenorm(x_nchw, g, b, conv_w, conv_b, *, tile_hw=2048,
            vmem_cap_bytes=40 * 1024 * 1024):
    """PreNorm forward. x_nchw: (N, C, H, W); g, b: (1, C, 1, 1);
    conv_w: (C_out, C, 1, 1); conv_b: (C_out,)."""
    N, C, H, W = x_nchw.shape
    C_out = conv_w.shape[0]
    HW = H * W

    # --- fold the LayerNorm affine into the 1x1 conv (done once, f32) ---
    w2d = conv_w.reshape(C_out, C).astype(jnp.float32)        # (C_out, C_in)
    g1 = g.reshape(C).astype(jnp.float32)
    b1 = b.reshape(C).astype(jnp.float32)
    w_fold = w2d * g1[None, :]                                # (C_out, C)
    cb_fold = (w2d @ b1 + conv_b.astype(jnp.float32)).reshape(C_out, 1)

    # --- natural layout: channels on sublanes, pixels on lanes (no transpose) ---
    x3 = x_nchw.reshape(N, C, HW)

    out_dtype = x_nchw.dtype
    in_bytes = jnp.dtype(x_nchw.dtype).itemsize
    out_bytes = jnp.dtype(out_dtype).itemsize
    ts = _pick_spatial_tile(HW, C, C_out, in_bytes, out_bytes,
                            tile_hw, vmem_cap_bytes)
    grid = (N, HW // ts)

    needed = (2 * ts * (C * in_bytes + C_out * out_bytes)
              + 2 * (C_out * C + C_out) * 4 + (2 << 20))
    vmem_limit = int(min(max(needed, 32 * 1024 * 1024), 60 * 1024 * 1024))

    out3 = pl.pallas_call(
        _prenorm_kernel,
        out_shape=jax.ShapeDtypeStruct((N, C_out, HW), out_dtype),
        grid_spec=pltpu.PrefetchScalarGridSpec(
            num_scalar_prefetch=0,
            grid=grid,
            in_specs=[
                pl.BlockSpec((None, C, ts), lambda n, s: (n, 0, s)),
                pl.BlockSpec((C_out, C), lambda n, s: (0, 0)),
                pl.BlockSpec((C_out, 1), lambda n, s: (0, 0)),
            ],
            out_specs=pl.BlockSpec((None, C_out, ts), lambda n, s: (n, 0, s)),
        ),
        compiler_params=pltpu.CompilerParams(
            dimension_semantics=("parallel", "parallel"),
            vmem_limit_bytes=vmem_limit,
        ),
    )(x3, w_fold, cb_fold)

    # (N, C_out, HW) -> (N, C_out, H, W): pure reshape, no transpose.
    return out3.reshape(N, C_out, H, W)


def prenorm_ref(x, g, b, conv_w, conv_b):
    """Pure-JAX reference matching the PyTorch module (LayerNorm + 1x1 conv)."""
    mean = jnp.mean(x, axis=1, keepdims=True)
    var = jnp.mean((x - mean) ** 2, axis=1, keepdims=True)
    xn = (x - mean) / jnp.sqrt(var + EPS) * g + b
    y = jnp.einsum("nchw,oc->nohw", xn,
                   conv_w.reshape(conv_w.shape[0], conv_w.shape[1]))
    return y + conv_b.reshape(1, -1, 1, 1)


if __name__ == "__main__":
    key = jax.random.PRNGKey(0)
    N, C, H, W = 2, 4, 16, 16  # HW = 256 -> one lane-dense 256-wide tile per image

    kx, kw, kb, kg, kbeta = jax.random.split(key, 5)
    x = jax.random.normal(kx, (N, C, H, W), dtype=jnp.float32)

    # LayerNorm affine (perturbed from the ones/zeros init so the affine fold
    # is actually exercised by the correctness check).
    g = 1.0 + 0.1 * jax.random.normal(kg, (1, C, 1, 1), dtype=jnp.float32)
    b = 0.1 * jax.random.normal(kbeta, (1, C, 1, 1), dtype=jnp.float32)

    # fn = Conv2d(C, C, kernel_size=1), deterministic init
    conv_w = 0.1 * jax.random.normal(kw, (C, C, 1, 1), dtype=jnp.float32)
    conv_b = 0.1 * jax.random.normal(kb, (C,), dtype=jnp.float32)

    out = prenorm(x, g, b, conv_w, conv_b)
    out = jax.block_until_ready(out)

    ref = prenorm_ref(x, g, b, conv_w, conv_b)
    assert out.shape == ref.shape
    assert jnp.allclose(out, ref, atol=1e-4, rtol=1e-4), \
        float(jnp.max(jnp.abs(out - ref)))

    print("KERNEL_OK")
</pallas_src>

<mosaic_0001>
module attributes {stable_mosaic.version = 11 : i64} {
  func.func @_prenorm_kernel(%arg0: i32, %arg1: i32, %arg2: memref<1x4x256xf32, #tpu.memory_space<vmem>>, %arg3: memref<4x4xf32, #tpu.memory_space<vmem>>, %arg4: memref<4x1xf32, #tpu.memory_space<vmem>>, %arg5: memref<1x4x256xf32, #tpu.memory_space<vmem>>) attributes {dimension_semantics = [#tpu.dimension_semantics<parallel>, #tpu.dimension_semantics<parallel>], iteration_bounds = array<i64: 2, 1>, scalar_prefetch = 0 : i64, scratch_operands = 0 : i64, tpu.core_type = #tpu.core_type<tc>, window_params = [{transform_indices = @transform_0, window_bounds = array<i64: 1, 4, 256>}, {pipeline_mode = #tpu.pipeline_mode<synchronous>, transform_indices = @transform_1, window_bounds = array<i64: 4, 4>}, {pipeline_mode = #tpu.pipeline_mode<synchronous>, transform_indices = @transform_2, window_bounds = array<i64: 4, 1>}, {transform_indices = @transform_3, window_bounds = array<i64: 1, 4, 256>}]} {
    %c0 = arith.constant 0 : index
    %c0_0 = arith.constant 0 : index
    %c0_1 = arith.constant 0 : index
    %0 = vector.load %arg2[%c0, %c0_0, %c0_1] : memref<1x4x256xf32, #tpu.memory_space<vmem>>, vector<1x4x256xf32>
    %1 = vector.shape_cast %0 : vector<1x4x256xf32> to vector<4x256xf32>
    %cst = arith.constant dense<0.000000e+00> : vector<256xf32>
    %2 = vector.multi_reduction <add>, %1, %cst [0] : vector<4x256xf32> to vector<256xf32>
    %3 = vector.shape_cast %2 : vector<256xf32> to vector<1x256xf32>
    %cst_2 = arith.constant 2.500000e-01 : f32
    %4 = vector.broadcast %cst_2 : f32 to vector<1x256xf32>
    %5 = arith.mulf %3, %4 : vector<1x256xf32>
    %6 = arith.mulf %1, %1 : vector<4x256xf32>
    %cst_3 = arith.constant dense<0.000000e+00> : vector<256xf32>
    %7 = vector.multi_reduction <add>, %6, %cst_3 [0] : vector<4x256xf32> to vector<256xf32>
    %8 = vector.shape_cast %7 : vector<256xf32> to vector<1x256xf32>
    %cst_4 = arith.constant 2.500000e-01 : f32
    %9 = vector.broadcast %cst_4 : f32 to vector<1x256xf32>
    %10 = arith.mulf %8, %9 : vector<1x256xf32>
    %11 = arith.mulf %5, %5 : vector<1x256xf32>
    %12 = arith.subf %10, %11 : vector<1x256xf32>
    %13 = vector.broadcast %5 : vector<1x256xf32> to vector<4x256xf32>
    %14 = arith.subf %1, %13 : vector<4x256xf32>
    %cst_5 = arith.constant 9.99999974E-6 : f32
    %15 = vector.broadcast %cst_5 : f32 to vector<1x256xf32>
    %16 = arith.addf %12, %15 : vector<1x256xf32>
    %17 = math.rsqrt %16 : vector<1x256xf32>
    %18 = vector.broadcast %17 : vector<1x256xf32> to vector<4x256xf32>
    %19 = arith.mulf %14, %18 : vector<4x256xf32>
    %c0_6 = arith.constant 0 : index
    %c0_7 = arith.constant 0 : index
    %20 = vector.load %arg3[%c0_6, %c0_7] : memref<4x4xf32, #tpu.memory_space<vmem>>, vector<4x4xf32>
    %c0_8 = arith.constant 0 : index
    %c0_9 = arith.constant 0 : index
    %21 = vector.load %arg4[%c0_8, %c0_9] : memref<4x1xf32, #tpu.memory_space<vmem>>, vector<4x1xf32>
    %22 = vector.extract_strided_slice %20 {offsets = [0, 0], sizes = [4, 1], strides = [1, 1]} : vector<4x4xf32> to vector<4x1xf32>
    %23 = vector.extract_strided_slice %19 {offsets = [0, 0], sizes = [1, 256], strides = [1, 1]} : vector<4x256xf32> to vector<1x256xf32>
    %24 = vector.broadcast %22 : vector<4x1xf32> to vector<4x256xf32>
    %25 = vector.broadcast %23 : vector<1x256xf32> to vector<4x256xf32>
    %26 = arith.mulf %24, %25 : vector<4x256xf32>
    %27 = vector.extract_strided_slice %20 {offsets = [0, 1], sizes = [4, 1], strides = [1, 1]} : vector<4x4xf32> to vector<4x1xf32>
    %28 = vector.extract_strided_slice %19 {offsets = [1, 0], sizes = [1, 256], strides = [1, 1]} : vector<4x256xf32> to vector<1x256xf32>
    %29 = vector.broadcast %27 : vector<4x1xf32> to vector<4x256xf32>
    %30 = vector.broadcast %28 : vector<1x256xf32> to vector<4x256xf32>
    %31 = arith.mulf %29, %30 : vector<4x256xf32>
    %32 = arith.addf %26, %31 : vector<4x256xf32>
    %33 = vector.extract_strided_slice %20 {offsets = [0, 2], sizes = [4, 1], strides = [1, 1]} : vector<4x4xf32> to vector<4x1xf32>
    %34 = vector.extract_strided_slice %19 {offsets = [2, 0], sizes = [1, 256], strides = [1, 1]} : vector<4x256xf32> to vector<1x256xf32>
    %35 = vector.broadcast %33 : vector<4x1xf32> to vector<4x256xf32>
    %36 = vector.broadcast %34 : vector<1x256xf32> to vector<4x256xf32>
    %37 = arith.mulf %35, %36 : vector<4x256xf32>
    %38 = arith.addf %32, %37 : vector<4x256xf32>
    %39 = vector.extract_strided_slice %20 {offsets = [0, 3], sizes = [4, 1], strides = [1, 1]} : vector<4x4xf32> to vector<4x1xf32>
    %40 = vector.extract_strided_slice %19 {offsets = [3, 0], sizes = [1, 256], strides = [1, 1]} : vector<4x256xf32> to vector<1x256xf32>
    %41 = vector.broadcast %39 : vector<4x1xf32> to vector<4x256xf32>
    %42 = vector.broadcast %40 : vector<1x256xf32> to vector<4x256xf32>
    %43 = arith.mulf %41, %42 : vector<4x256xf32>
    %44 = arith.addf %38, %43 : vector<4x256xf32>
    %45 = vector.broadcast %21 : vector<4x1xf32> to vector<4x256xf32>
    %46 = arith.addf %44, %45 : vector<4x256xf32>
    %c0_10 = arith.constant 0 : index
    %c0_11 = arith.constant 0 : index
    %c0_12 = arith.constant 0 : index
    %47 = vector.load %arg5[%c0_10, %c0_11, %c0_12] : memref<1x4x256xf32, #tpu.memory_space<vmem>>, vector<1x4x256xf32>
    %48 = vector.shape_cast %47 : vector<1x4x256xf32> to vector<4x256xf32>
    %49 = vector.shape_cast %46 : vector<4x256xf32> to vector<1x4x256xf32>
    tpu.vector_store %arg5[%c0_10, %c0_11, %c0_12], %49 {strides = array<i32>} : memref<1x4x256xf32, #tpu.memory_space<vmem>>, vector<1x4x256xf32>,
    return
  }
  func.func @transform_0(%arg0: i32, %arg1: i32) -> (i32, i32, i32) {
    %c0_i32 = arith.constant 0 : i32
    %c0_i32_0 = arith.constant 0 : i32
    return %arg0, %c0_i32, %arg1 : i32, i32, i32
  }
  func.func @transform_1(%arg0: i32, %arg1: i32) -> (i32, i32) {
    %c0_i32 = arith.constant 0 : i32
    %c0_i32_0 = arith.constant 0 : i32
    %c0_i32_1 = arith.constant 0 : i32
    return %c0_i32, %c0_i32_0 : i32, i32
  }
  func.func @transform_2(%arg0: i32, %arg1: i32) -> (i32, i32) {
    %c0_i32 = arith.constant 0 : i32
    %c0_i32_0 = arith.constant 0 : i32
    %c0_i32_1 = arith.constant 0 : i32
    return %c0_i32, %c0_i32_0 : i32, i32
  }
  func.func @transform_3(%arg0: i32, %arg1: i32) -> (i32, i32, i32) {
    %c0_i32 = arith.constant 0 : i32
    %c0_i32_0 = arith.constant 0 : i32
    return %arg0, %c0_i32, %arg1 : i32, i32, i32
  }
}

</mosaic_0001>

<llo_original>
// kernel: tpu_custom_call.1
$region0: #{tpu_custom_call.1}
  #allocation0 [shape = 'u32[]', space=smem, size = 0x4, offset = 0x4, fixed_abs, tag = 'smem constant byte address 0x4 - core index']
  #allocation1 [shape = 'u32[144,128]{1,0:T(1,128)}', space=vmem, size = 0x12000, scoped, tag = 'internal scratch']
  %s0 = inlined_call_operand.hbm [shape: f32[2,4,256], index: 0, kind: input, shape index: {}]
  %s1 = inlined_call_operand.vmem [shape: f32[4,4], index: 1, kind: input, shape index: {}]
  %s2 = inlined_call_operand.vmem [shape: f32[4,1], index: 2, kind: input, shape index: {}]
  %s3 = inlined_call_operand.hbm [shape: f32[2,4,256], index: 3, kind: output, shape index: {}]
  %s4 = sld [smem:[#allocation0]]
  $region49: #{tpu_custom_call.1} parent=0
    _
  %s6 = ssub.s32 1, %s4
  %s7 = scalar_select 0, %s6, %s4
  $region1: #{tpu_custom_call.1} parent=0
    #allocation2 [shape = 'u8[8192]{0}', space=vmem, size = 0x2000, scoped, tag = 'input window, operand 0']
    #allocation3 [shape = 's32[2]{0}', space=sflag, size = 0x8, scoped, tag = 'scoped memory for tpu_custom_call.1']
    #allocation4 [shape = 's32[2]{0}', space=sflag, size = 0x8, scoped, tag = 'scoped memory for tpu_custom_call.1']
    #allocation5 [shape = 'u8[8192]{0}', space=vmem, size = 0x2000, scoped, tag = 'output window, operand 0']
    %8 = vsyncpa [#allocation3], 0
    %s9 = scalar_lea.sflag [#allocation3], 1
    %10 = vsyncpa %s9, 0
    %11 = vsyncpa [#allocation4], 0
    %s12 = scalar_lea.sflag [#allocation4], 1
    %13 = vsyncpa %s12, 0
    loop: start=0, step=1, limit=4
    $region2: #{tpu_custom_call.1} parent=1 // loop_pre_header
      _
    $region3: #{tpu_custom_call.1} parent=1 // loop_header
      %s15 = sphi 0, %s19
      %p16 = scmp.ge.s32.totalorder %s15, 4
      %s22 = sphi 0, %s34
      %s23 = sphi 0, %s30
      %s24 = sphi 0, %s22
      %s25 = sphi 0, %s23
      %s26 = sphi 0, %s24
      %s27 = sphi 0, %s25
      %s39 = sphi 0, %s41
      %s42 = sphi 0, %s39
      %s43 = sphi 0, %s42
      %s59 = sphi 0, %s43
      %s63 = sphi 0, %s63
      %s65 = sphi 0, %s63
      %s66 = sphi 0, %s65
      %s80 = sphi 0, %s66
      %s84 = sphi 0, %s84
      %s86 = sphi 0, %s84
      %s87 = sphi 0, %s86
      %s101 = sphi 0, %s87
      %s109 = sphi 0, %s111
      %s112 = sphi 0, %s109
      %s113 = sphi 0, %s112
      %s129 = sphi 0, %s113
    $region4: #{tpu_custom_call.1} parent=1 // loop_header_branch
      %18 = sbr.rel (%p16) target = $region8
    $region5: #{tpu_custom_call.1} parent=1 // loop_body
      %s20 = ssub.s32 %s15, 1
      %s21 = ssub.s32 %s15, 2
      %s28 = sadd.s32 1, %s23
      %p29 = scmp.ge.s32.totalorder %s28, 1
      %s30 = scalar_select %p29, 0, %s28
      %s31 = sadd.s32 1, %s22
      %s32 = scalar_select %p29, %s31, %s22
      %p33 = scmp.ge.s32.totalorder %s32, 2
      %s34 = scalar_select %p33, 0, %s32
      %s35 = ssub.s32 %s22, %s34
      %s36 = ssub.s32 %s23, %s30
      %s37 = sor.u32 %s35, %s36
      %p38 = scmp.eq.s32.totalorder %s37, 0
      %s40 = sadd.s32 %s39, 1
      %s41 = scalar_select %p38, %s39, %s40
      %p44 = pneg %p38
      %p45 = scmp.eq.s32.totalorder %s15, 1
      %p46 = por %p44, %p45
      %p47 = scmp.ne.s32.totalorder %s39, %s42
      %p48 = scmp.eq.s32.totalorder %s15, 0
      %p49 = por %p47, %p48
      %p50 = scmp.ne.s32.totalorder %s39, %s42
      %p51 = scmp.eq.s32.totalorder %s20, 1
      %p52 = por %p50, %p51
      %p53 = scmp.ne.s32.totalorder %s42, %s43
      %p54 = scmp.eq.s32.totalorder %s20, 0
      %p55 = por %p53, %p54
      %p56 = scmp.ne.s32.totalorder %s42, %s43
      %p57 = scmp.eq.s32.totalorder %s21, 1
      %p58 = por %p56, %p57
      %p60 = scmp.ne.s32.totalorder %s43, %s59
      %p61 = scmp.eq.s32.totalorder %s21, 0
      %p62 = por %p60, %p61
      %s64 = sadd.s32 %s63, 1
      %p67 = scmp.eq.s32.totalorder %s15, 1
      %p68 = scmp.ne.s32.totalorder %s63, %s65
      %p69 = scmp.eq.s32.totalorder %s15, 0
      %p70 = por %p68, %p69
      %p71 = scmp.ne.s32.totalorder %s63, %s65
      %p72 = scmp.eq.s32.totalorder %s20, 1
      %p73 = por %p71, %p72
      %p74 = scmp.ne.s32.totalorder %s65, %s66
      %p75 = scmp.eq.s32.totalorder %s20, 0
      %p76 = por %p74, %p75
      %p77 = scmp.ne.s32.totalorder %s65, %s66
      %p78 = scmp.eq.s32.totalorder %s21, 1
      %p79 = por %p77, %p78
      %p81 = scmp.ne.s32.totalorder %s66, %s80
      %p82 = scmp.eq.s32.totalorder %s21, 0
      %p83 = por %p81, %p82
      %s85 = sadd.s32 %s84, 1
      %p88 = scmp.eq.s32.totalorder %s15, 1
      %p89 = scmp.ne.s32.totalorder %s84, %s86
      %p90 = scmp.eq.s32.totalorder %s15, 0
      %p91 = por %p89, %p90
      %p92 = scmp.ne.s32.totalorder %s84, %s86
      %p93 = scmp.eq.s32.totalorder %s20, 1
      %p94 = por %p92, %p93
      %p95 = scmp.ne.s32.totalorder %s86, %s87
      %p96 = scmp.eq.s32.totalorder %s20, 0
      %p97 = por %p95, %p96
      %p98 = scmp.ne.s32.totalorder %s86, %s87
      %p99 = scmp.eq.s32.totalorder %s21, 1
      %p100 = por %p98, %p99
      %p102 = scmp.ne.s32.totalorder %s87, %s101
      %p103 = scmp.eq.s32.totalorder %s21, 0
      %p104 = por %p102, %p103
      %s105 = ssub.s32 %s22, %s34
      %s106 = ssub.s32 %s23, %s30
      %s107 = sor.u32 %s105, %s106
      %p108 = scmp.eq.s32.totalorder %s107, 0
      %s110 = sadd.s32 %s109, 1
      %s111 = scalar_select %p108, %s109, %s110
      %p114 = pneg %p108
      %p115 = scmp.eq.s32.totalorder %s15, 1
      %p116 = por %p114, %p115
      %p117 = scmp.ne.s32.totalorder %s109, %s112
      %p118 = scmp.eq.s32.totalorder %s15, 0
      %p119 = por %p117, %p118
      %p120 = scmp.ne.s32.totalorder %s109, %s112
      %p121 = scmp.eq.s32.totalorder %s20, 1
      %p122 = por %p120, %p121
      %p123 = scmp.ne.s32.totalorder %s112, %s113
      %p124 = scmp.eq.s32.totalorder %s20, 0
      %p125 = por %p123, %p124
      %p126 = scmp.ne.s32.totalorder %s112, %s113
      %p127 = scmp.eq.s32.totalorder %s21, 1
      %p128 = por %p126, %p127
      %p130 = scmp.ne.s32.totalorder %s113, %s129
      %p131 = scmp.eq.s32.totalorder %s21, 0
      %p132 = por %p130, %p131
      %p133 = scmp.le.s32.totalorder 1, %s15
      %p134 = scmp.lt.s32.totalorder %s15, 3
      %p135 = pnand %p133, %p134
      %p136 = pneg %p135
      // Predicated region
      $region9: #{tpu_custom_call.1} parent=5 // pred_check
        _
      $region10: #{tpu_custom_call.1} parent=5 // pred_check_branch
        %138 = sbr.rel (%p135) target = $region12
      $region11: #{tpu_custom_call.1} parent=5 // pred_region
        %s139 = ssub.s32 %s15, 1
        // Predicated region
        $region13: #{tpu_custom_call.1} parent=11 // pred_check
          %p140 = pneg %p76
        $region14: #{tpu_custom_call.1} parent=11 // pred_check_branch
          %142 = sbr.rel (%p140) target = $region16
        $region15: #{tpu_custom_call.1} parent=11 // pred_region
          _
        $region16: #{tpu_custom_call.1} parent=11 // pred_fallthru
          _
        // Predicated region
        $region17: #{tpu_custom_call.1} parent=11 // pred_check
          %p143 = pneg %p97
        $region18: #{tpu_custom_call.1} parent=11 // pred_check_branch
          %145 = sbr.rel (%p143) target = $region20
        $region19: #{tpu_custom_call.1} parent=11 // pred_region
          _
        $region20: #{tpu_custom_call.1} parent=11 // pred_fallthru
          _
      $region12: #{tpu_custom_call.1} parent=5 // pred_fallthru
        _
      %p146 = scmp.lt.s32.totalorder %s15, 2
      // Predicated region
      $region21: #{tpu_custom_call.1} parent=5 // pred_check
        %p147 = pneg %p146
      $region22: #{tpu_custom_call.1} parent=5 // pred_check_branch
        %149 = sbr.rel (%p147) target = $region24
      $region23: #{tpu_custom_call.1} parent=5 // pred_region
        // Predicated region
        $region25: #{tpu_custom_call.1} parent=23 // pred_check
          %p150 = pneg %p49
        $region26: #{tpu_custom_call.1} parent=23 // pred_check_branch
          %152 = sbr.rel (%p150) target = $region28
        $region27: #{tpu_custom_call.1} parent=23 // pred_region
          %s153 = sand.u32 %s39, 1
          %s154 = scalar_lea.sflag [#allocation3], %s153
          %s155 = sand.u32 %s39, 1
          %s156 = smul.addr %s155, 8
          %s157 = scalar_lea.vmem [#allocation2], %s156
          %s158 = smul.u32 2, %s23
          %s160 = ssub.s32 128, 128
          %161 = vsyncadd %s154, %s160
          %s162 = smul.addr %s22, 2
          %s163 = sadd.s32 %s158, %s162
          %s164 = smul.addr %s163, 64
          %s165 = scalar_lea.hbm %s0, %s164
          %s167 = sshll.u32 %s157, 4
          %s168 = int_to_ptr.vmem [resolvable:$true] %s167
          %170 = dma.hbm_to_vmem [thread:$0]  %s165, 128, %s168, %s154
        $region28: #{tpu_custom_call.1} parent=23 // pred_fallthru
          _
      $region24: #{tpu_custom_call.1} parent=5 // pred_fallthru
        _
      %p171 = scmp.le.s32.totalorder 1, %s15
      %p172 = scmp.lt.s32.totalorder %s15, 3
      %p173 = pnand %p171, %p172
      %p174 = pneg %p173
      // Predicated region
      $region29: #{tpu_custom_call.1} parent=5 // pred_check
        _
      $region30: #{tpu_custom_call.1} parent=5 // pred_check_branch
        %176 = sbr.rel (%p173) target = $region32
      $region31: #{tpu_custom_call.1} parent=5 // pred_region
        %s177 = ssub.s32 %s15, 1
        %s178 = sand.u32 %s42, 1
        %s179 = scalar_lea.sflag [#allocation3], %s178
        %s180 = sand.u32 %s42, 1
        %s181 = smul.addr %s180, 8
        %s182 = scalar_lea.vmem [#allocation2], %s181
        // Predicated region
        $region33: #{tpu_custom_call.1} parent=31 // pred_check
          %p183 = pneg %p55
        $region34: #{tpu_custom_call.1} parent=31 // pred_check_branch
          %185 = sbr.rel (%p183) target = $region36
        $region35: #{tpu_custom_call.1} parent=31 // pred_region
          %186 = dma.done %s179, 128
        $region36: #{tpu_custom_call.1} parent=31 // pred_fallthru
          _
        %s187 = sand.u32 %s42, 1
        %s188 = scalar_lea.sflag [#allocation3], %s187
        %s189 = sand.u32 %s42, 1
        %s190 = smul.addr %s189, 8
        %s191 = scalar_lea.vmem [#allocation2], %s190
        %p192 = pneg %p55
        %p193 = pneg %p52
        %p194 = pneg %p76
        %p195 = pneg %p73
        %p196 = pneg %p97
        %p197 = pneg %p94
        %p198 = pneg %p125
        %p199 = pneg %p122
        %s200 = sand.u32 %s112, 1
        %s201 = scalar_lea.sflag [#allocation4], %s200
        %s202 = sand.u32 %s112, 1
        %s203 = smul.addr %s202, 8
        %s204 = scalar_lea.vmem [#allocation5], %s203
        %s205 = smul.u32 2, %s25
        %s206 = smul.u32 2, %s25
        %v207 = vld [vmem:[%s182] sm:$0xff]
        %v209 = vcombine.high %v207, %v207
        %vm211 = vcmask 1043456
        %v212 = vsel %vm211, %v207, 0.0
        %v213 = vrot.slane %v212, 4
        %v214 = vadd.f32 %v212, %v213
        %v215 = vrot.slane %v214, 2
        %v216 = vadd.f32 %v214, %v215
        %v217 = vrot.slane %v216, 1
        %v218 = vadd.f32 %v216, %v217
        %v219 = vsel %vm211, %v209, 0.0
        %v220 = vrot.slane %v219, 4
        %v221 = vadd.f32 %v219, %v220
        %v222 = vrot.slane %v221, 2
        %v223 = vadd.f32 %v221, %v222
        %v224 = vrot.slane %v223, 1
        %v225 = vadd.f32 %v223, %v224
        %v226 = vmul.f32 %v218, 0.25
        %v227 = vmul.f32 %v225, 0.25
        %v228 = vmul.f32 %v207, %v207
        %v230 = vcombine.high %v228, %v228
        %v232 = vsel %vm211, %v228, 0.0
        %v233 = vrot.slane %v232, 4
        %v234 = vadd.f32 %v232, %v233
        %v235 = vrot.slane %v234, 2
        %v236 = vadd.f32 %v234, %v235
        %v237 = vrot.slane %v236, 1
        %v238 = vadd.f32 %v236, %v237
        %v239 = vsel %vm211, %v230, 0.0
        %v240 = vrot.slane %v239, 4
        %v241 = vadd.f32 %v239, %v240
        %v242 = vrot.slane %v241, 2
        %v243 = vadd.f32 %v241, %v242
        %v244 = vrot.slane %v243, 1
        %v245 = vadd.f32 %v243, %v244
        %v246 = vmul.f32 %v238, 0.25
        %v247 = vmul.f32 %v245, 0.25
        %v248 = vmul.f32 %v226, %v226
        %v249 = vmul.f32 %v227, %v227
        %v250 = vsub.f32 %v246, %v248
        %v251 = vsub.f32 %v247, %v249
        %v254 = vcombine.low %v226, %v227
        %v256 = vsub.f32 %v207, %v254
        %v257 = vadd.f32 %v250, 1e-05
        %v258 = vadd.f32 %v251, 1e-05
        %v259 = vrsqrt.pop %v257
        %v260 = vrsqrt.pop %v258
        %v263 = vcombine.low %v259, %v260
        %v265 = vmul.f32 %v256, %v263
        %v266 = vld [vmem:[%s1] sm:$0xf]
        %v267 = vld [vmem:[%s2] sm:$0xf]
        %269 = vset.pattern.permute.xlu0 0
        %270 = vperm.xlu0 %269, %v266
        %v271 = vpop.permute.xlu0 %270
        %v274 = vlaneseq
        %v275 = vshrl.u32 %v274, 7
        %v276 = vsub.s32 0, %v275
        %v277 = vrot.slane %v265, %v276
        %v278 = vlaneseq
        %v279 = vshrl.u32 %v278, 7
        %v280 = vsub.s32 4, %v279
        %v281 = vrot.slane %v265, %v280
        %v284 = vlaneseq
        %v285 = vshrl.u32 %v284, 7
        %v286 = vsub.s32 0, %v285
        %v287 = vrot.slane %v277, %v286
        %v288 = vlaneseq
        %v289 = vshrl.u32 %v288, 7
        %v290 = vsub.s32 0, %v289
        %v291 = vrot.slane %v281, %v290
        %v292 = vmul.f32 %v271, %v287
        %v293 = vmul.f32 %v271, %v291
        %294 = vset.pattern.permute.xlu0 1
        %295 = vperm.xlu0 %294, %v266
        %v296 = vpop.permute.xlu0 %295
        %v298 = vlaneseq
        %v299 = vshrl.u32 %v298, 7
        %v300 = vsub.s32 1, %v299
        %v301 = vrot.slane %v265, %v300
        %v302 = vlaneseq
        %v303 = vshrl.u32 %v302, 7
        %v304 = vsub.s32 5, %v303
        %v305 = vrot.slane %v265, %v304
        %v308 = vlaneseq
        %v309 = vshrl.u32 %v308, 7
        %v310 = vsub.s32 1, %v309
        %v311 = vrot.slane %v301, %v310
        %v312 = vlaneseq
        %v313 = vshrl.u32 %v312, 7
        %v314 = vsub.s32 1, %v313
        %v315 = vrot.slane %v305, %v314
        %v316 = vmul.f32 %v296, %v311
        %v317 = vmul.f32 %v296, %v315
        %v318 = vadd.f32 %v292, %v316
        %v319 = vadd.f32 %v293, %v317
        %320 = vset.pattern.permute.xlu0 2
        %321 = vperm.xlu0 %320, %v266
        %v322 = vpop.permute.xlu0 %321
        %v324 = vlaneseq
        %v325 = vshrl.u32 %v324, 7
        %v326 = vsub.s32 2, %v325
        %v327 = vrot.slane %v265, %v326
        %v328 = vlaneseq
        %v329 = vshrl.u32 %v328, 7
        %v330 = vsub.s32 6, %v329
        %v331 = vrot.slane %v265, %v330
        %v334 = vlaneseq
        %v335 = vshrl.u32 %v334, 7
        %v336 = vsub.s32 2, %v335
        %v337 = vrot.slane %v327, %v336
        %v338 = vlaneseq
        %v339 = vshrl.u32 %v338, 7
        %v340 = vsub.s32 2, %v339
        %v341 = vrot.slane %v331, %v340
        %v342 = vmul.f32 %v322, %v337
        %v343 = vmul.f32 %v322, %v341
        %v344 = vadd.f32 %v318, %v342
        %v345 = vadd.f32 %v319, %v343
        %346 = vset.pattern.permute.xlu0 3
        %347 = vperm.xlu0 %346, %v266
        %v348 = vpop.permute.xlu0 %347
        %v350 = vlaneseq
        %v351 = vshrl.u32 %v350, 7
        %v352 = vsub.s32 3, %v351
        %v353 = vrot.slane %v265, %v352
        %v354 = vlaneseq
        %v355 = vshrl.u32 %v354, 7
        %v356 = vsub.s32 7, %v355
        %v357 = vrot.slane %v265, %v356
        %v360 = vlaneseq
        %v361 = vshrl.u32 %v360, 7
        %v362 = vsub.s32 3, %v361
        %v363 = vrot.slane %v353, %v362
        %v364 = vlaneseq
        %v365 = vshrl.u32 %v364, 7
        %v366 = vsub.s32 3, %v365
        %v367 = vrot.slane %v357, %v366
        %v368 = vmul.f32 %v348, %v363
        %v369 = vmul.f32 %v348, %v367
        %v370 = vadd.f32 %v344, %v368
        %v371 = vadd.f32 %v345, %v369
        %373 = vset.pattern.permute.xlu0 0
        %374 = vperm.xlu0 %373, %v267
        %v375 = vpop.permute.xlu0 %374
        %v377 = vadd.f32 %v370, %v375
        %v378 = vadd.f32 %v371, %v375
        %v381 = vcombine.low %v377, %v378
        %383 = vst [vmem:[%s204] sm:$0xff] %v381
        %s384 = sand.u32 %s112, 1
        %s385 = scalar_lea.sflag [#allocation4], %s384
        %s386 = sand.u32 %s112, 1
        %s387 = smul.addr %s386, 8
        %s388 = scalar_lea.vmem [#allocation5], %s387
        // Predicated region
        $region37: #{tpu_custom_call.1} parent=31 // pred_check
          %p389 = pneg %p122
        $region38: #{tpu_custom_call.1} parent=31 // pred_check_branch
          %391 = sbr.rel (%p389) target = $region40
        $region39: #{tpu_custom_call.1} parent=31 // pred_region
          %s392 = smul.u32 2, %s25
          %s394 = ssub.s32 128, 128
          %395 = vsyncadd %s385, %s394
          %s396 = smul.addr %s24, 2
          %s397 = sadd.s32 %s392, %s396
          %s398 = smul.addr %s397, 64
          %s399 = scalar_lea.hbm %s3, %s398
          %s401 = sshll.u32 %s388, 4
          %s402 = int_to_ptr.vmem [resolvable:$true] %s401
          %404 = dma.vmem_to_hbm [thread:$0]  %s402, 128, %s399, %s385
        $region40: #{tpu_custom_call.1} parent=31 // pred_fallthru
          _
      $region32: #{tpu_custom_call.1} parent=5 // pred_fallthru
        _
      %p405 = scmp.le.s32.totalorder 2, %s15
      // Predicated region
      $region41: #{tpu_custom_call.1} parent=5 // pred_check
        %p406 = pneg %p405
      $region42: #{tpu_custom_call.1} parent=5 // pred_check_branch
        %408 = sbr.rel (%p406) target = $region44
      $region43: #{tpu_custom_call.1} parent=5 // pred_region
        %s409 = ssub.s32 %s15, 2
        // Predicated region
        $region45: #{tpu_custom_call.1} parent=43 // pred_check
          %p410 = pneg %p128
        $region46: #{tpu_custom_call.1} parent=43 // pred_check_branch
          %412 = sbr.rel (%p410) target = $region48
        $region47: #{tpu_custom_call.1} parent=43 // pred_region
          %s413 = sand.u32 %s113, 1
          %s414 = scalar_lea.sflag [#allocation4], %s413
          %s415 = sand.u32 %s113, 1
          %s416 = smul.addr %s415, 8
          %s417 = scalar_lea.vmem [#allocation5], %s416
          %418 = dma.done %s414, 128
        $region48: #{tpu_custom_call.1} parent=43 // pred_fallthru
          _
      $region44: #{tpu_custom_call.1} parent=5 // pred_fallthru
        _
    $region6: #{tpu_custom_call.1} parent=1 // loop_footer
      %s19 = sadd.s32 1, %s15
    $region7: #{tpu_custom_call.1} parent=1 // loop_footer_branch
      %14 = sbr.rel target = $region3
    $region8: #{tpu_custom_call.1} parent=1 // loop_exit
      _
    %419 = vsyncpa [#allocation3], 1
    %s420 = scalar_lea.sflag [#allocation3], 1
    %421 = vsyncpa %s420, 1
    %422 = vsyncpa [#allocation4], 1
    %s423 = scalar_lea.sflag [#allocation4], 1
    %424 = vsyncpa %s423, 1

</llo_original>
